<compile_context>
chip_gen: v7x
topology: tpu7x:2x2x1
jax: 0.10.0
libtpu: 0.0.40
codegen_flags: <defaults>
</compile_context>

<pallas_src>
import jax
import jax.numpy as jnp
from jax.experimental import pallas as pl
from jax.experimental.pallas import tpu as pltpu


def _patch_embed_kernel(x_ref, w_ref, b_ref, o_ref):
    # x_ref: (1, K, TP)  bf16 -- K-major patch slab (canonical MXU orientation)
    # w_ref: (TE, K)     bf16 -- flattened conv-weight tile (VMEM-resident)
    # b_ref: (TE, 1)     f32  -- bias column
    # o_ref: (1, TE, TP)      -- output block, already (E, patches) oriented
    acc = jax.lax.dot_general(
        w_ref[...],
        x_ref[0],
        dimension_numbers=(((1,), (0,)), ((), ())),  # (TE,K) x (K,TP) -> (TE,TP)
        preferred_element_type=jnp.float32,
    )
    o_ref[0] = (acc + b_ref[...]).astype(o_ref.dtype)


def _pick_tile(dim, candidates):
    """Largest candidate that evenly divides `dim`, else the full dim."""
    for c in candidates:
        if c <= dim and dim % c == 0:
            return c
    return dim


def _round_up(n, m):
    return ((n + m - 1) // m) * m


def patch_embed(x, weight, bias, patch_size, out_dtype=None):
    """x: (B, C, H, W); weight: (E, C, ph, pw); bias: (E,) -> (B, E, num_patches).

    out_dtype: output dtype; defaults to x.dtype.  Pass jnp.bfloat16 when the
    downstream consumer allows it to halve store traffic (biggest win on v5e).
    """
    B, C, H, W = x.shape
    ph, pw = patch_size
    assert H % ph == 0 and W % pw == 0, "image size must be divisible by patch size"
    Gh, Gw = H // ph, W // pw
    P = Gh * Gw                       # num_patches per image
    E = weight.shape[0]
    K = C * ph * pw
    out_dtype = x.dtype if out_dtype is None else out_dtype
    out_itemsize = jnp.dtype(out_dtype).itemsize

    K_pad = _round_up(K, 128)         # lane-aligned contraction dim
    P_pad = _round_up(P, 128)         # lane-dense output patch axis

    # --- layout glue (single HBM pass -> canonical (B, K, P) orientation) -----
    # K ordered (C, ph, pw) to match the torch Conv2d weight layout.
    patches = (
        x.reshape(B, C, Gh, ph, Gw, pw)
        .transpose(0, 1, 3, 5, 2, 4)          # (B, C, ph, pw, Gh, Gw)
        .reshape(B, K, P)
        .astype(jnp.bfloat16)
    )
    w_flat = weight.reshape(E, K).astype(jnp.bfloat16)        # (E, K)
    if K_pad != K:                                            # zero-pad: no effect on dot
        patches = jnp.pad(patches, ((0, 0), (0, K_pad - K), (0, 0)))
        w_flat = jnp.pad(w_flat, ((0, 0), (0, K_pad - K)))
    if P_pad != P:
        patches = jnp.pad(patches, ((0, 0), (0, 0), (0, P_pad - P)))
    b_col = bias.astype(jnp.float32).reshape(E, 1)            # (E, 1)

    # --- tiling ----------------------------------------------------------------
    # Full-E weight tile: the (much larger) patch stream is read exactly once.
    if E * K_pad * 2 <= (8 << 20):
        TE = E
    else:
        TE = _pick_tile(E, (1024, 512, 256, 128))

    VMEM_BUDGET = 48 << 20            # safe ceiling for v7x (64 MiB physical per TC)
    HEADROOM = 6 << 20                # Mosaic internal scratch / misc

    def _footprint(te, tp):
        # double-buffered in/out tiles + resident weight/bias + f32 matmul acc
        return (2 * K_pad * tp * 2            # bf16 patch tile x2
                + 2 * te * tp * out_itemsize  # output tile x2
                + 2 * te * K_pad * 2          # bf16 weight tile x2
                + 2 * te * 4                  # bias x2
                + te * tp * 4)                # f32 accumulator intermediate

    TP = 128
    for cand in (2048, 1024, 512, 256, 128):
        if cand <= P_pad and P_pad % cand == 0 and _footprint(TE, cand) + HEADROOM <= VMEM_BUDGET:
            TP = cand
            break

    # v7x shards an all-parallel grid across 2 TensorCores: keep step count even
    # so neither core gets a 2x share.  v5e/v6e (1 TC) are unaffected.
    if ((E // TE) * B * (P_pad // TP)) % 2 == 1:
        if TP >= 256:
            TP //= 2                          # cheapest: no extra HBM traffic
        elif TE == E and E % 16 == 0:
            TE = E // 2                       # fallback: patch stream re-read 2x

    grid = (E // TE, B, P_pad // TP)          # E outermost -> weight tile stays resident
    vmem_limit = min(max(_footprint(TE, TP) + HEADROOM, 16 << 20), VMEM_BUDGET)

    cost = pl.CostEstimate(
        flops=2 * B * P_pad * K_pad * E,
        transcendentals=0,
        bytes_accessed=((E // TE) * B * P_pad * K_pad * 2   # patch reads (per E-tile)
                        + E * K_pad * 2                      # weight
                        + E * 4                              # bias
                        + B * E * P_pad * out_itemsize),     # output
    )

    out = pl.pallas_call(
        _patch_embed_kernel,
        out_shape=jax.ShapeDtypeStruct((B, E, P_pad), out_dtype),
        grid_spec=pl.GridSpec(
            grid=grid,
            in_specs=[
                pl.BlockSpec((1, K_pad, TP), lambda e, b, p: (b, 0, p)),   # patches (B,K,P)
                pl.BlockSpec((TE, K_pad), lambda e, b, p: (e, 0)),          # weight
                pl.BlockSpec((TE, 1), lambda e, b, p: (e, 0)),              # bias
            ],
            out_specs=pl.BlockSpec((1, TE, TP), lambda e, b, p: (b, e, p)),
        ),
        compiler_params=pltpu.CompilerParams(
            dimension_semantics=("parallel", "parallel", "parallel"),
            vmem_limit_bytes=vmem_limit,
        ),
        cost_estimate=cost,
    )(patches, w_flat, b_col)

    if P_pad != P:
        out = out[:, :, :P]
    return out                         # (B, E, num_patches)


if __name__ == "__main__":
    # Small shapes consistent with the module: img 16x16, patch 4x4,
    # in_chans=4, embed_dim=32, batch=2 -> num_patches = 16.
    B, C, H, W = 2, 4, 16, 16
    ph, pw = 4, 4
    E = 32

    key = jax.random.PRNGKey(0)
    kx, kw, kb = jax.random.split(key, 3)
    x = jax.random.normal(kx, (B, C, H, W), dtype=jnp.float32)
    weight = jax.random.normal(kw, (E, C, ph, pw), dtype=jnp.float32) * 0.02
    bias = jax.random.normal(kb, (E,), dtype=jnp.float32) * 0.02

    y = jax.block_until_ready(patch_embed(x, weight, bias, (ph, pw)))

    # Pure-JAX f32 reference (same math as torch Conv2d stride==kernel + flatten(2)).
    Gh, Gw = H // ph, W // pw
    patches_ref = (
        x.reshape(B, C, Gh, ph, Gw, pw)
        .transpose(0, 2, 4, 1, 3, 5)
        .reshape(B, Gh * Gw, C * ph * pw)
    )
    y_ref = jnp.einsum("bpk,ek->bep", patches_ref, weight.reshape(E, -1)) + bias[None, :, None]

    assert y.shape == (B, E, Gh * Gw), y.shape
    # bf16 inputs with f32 accumulation -> loosened tolerance vs f32 reference.
    assert jnp.allclose(y, y_ref, atol=2e-2, rtol=2e-2), float(jnp.max(jnp.abs(y - y_ref)))
    print("KERNEL_OK")
</pallas_src>

<mosaic_0001>
module attributes {stable_mosaic.version = 11 : i64} {
  func.func @_patch_embed_kernel(%arg0: i32, %arg1: i32, %arg2: i32, %arg3: memref<1x128x128xbf16, #tpu.memory_space<vmem>>, %arg4: memref<32x128xbf16, #tpu.memory_space<vmem>>, %arg5: memref<32x1xf32, #tpu.memory_space<vmem>>, %arg6: memref<1x32x128xf32, #tpu.memory_space<vmem>>) attributes {dimension_semantics = [#tpu.dimension_semantics<parallel>, #tpu.dimension_semantics<parallel>, #tpu.dimension_semantics<parallel>], iteration_bounds = array<i64: 1, 2, 1>, scalar_prefetch = 0 : i64, scratch_operands = 0 : i64, tpu.core_type = #tpu.core_type<tc>, window_params = [{transform_indices = @transform_0, window_bounds = array<i64: 1, 128, 128>}, {transform_indices = @transform_1, window_bounds = array<i64: 32, 128>}, {transform_indices = @transform_2, window_bounds = array<i64: 32, 1>}, {transform_indices = @transform_3, window_bounds = array<i64: 1, 32, 128>}]} {
    %c0 = arith.constant 0 : index
    %c0_0 = arith.constant 0 : index
    %0 = vector.load %arg4[%c0, %c0_0] : memref<32x128xbf16, #tpu.memory_space<vmem>>, vector<32x128xbf16>
    %c0_1 = arith.constant 0 : index
    %c0_2 = arith.constant 0 : index
    %c0_3 = arith.constant 0 : index
    %1 = vector.load %arg3[%c0_1, %c0_2, %c0_3] : memref<1x128x128xbf16, #tpu.memory_space<vmem>>, vector<1x128x128xbf16>
    %2 = vector.shape_cast %1 : vector<1x128x128xbf16> to vector<128x128xbf16>
    %cst = arith.constant dense<0.000000e+00> : vector<32x128xf32>
    %3 = tpu.matmul %0, %2, %cst {dimension_numbers = #tpu.dot_dimension_numbers<[1], [0], [0], [1], [0, 0, 1, 1], [], []>} : vector<32x128xbf16>, vector<128x128xbf16>, vector<32x128xf32> -> vector<32x128xf32>
    %c0_4 = arith.constant 0 : index
    %c0_5 = arith.constant 0 : index
    %4 = vector.load %arg5[%c0_4, %c0_5] : memref<32x1xf32, #tpu.memory_space<vmem>>, vector<32x1xf32>
    %5 = vector.broadcast %4 : vector<32x1xf32> to vector<32x128xf32>
    %6 = arith.addf %3, %5 : vector<32x128xf32>
    %c0_6 = arith.constant 0 : index
    %c0_7 = arith.constant 0 : index
    %c0_8 = arith.constant 0 : index
    %7 = vector.load %arg6[%c0_6, %c0_7, %c0_8] : memref<1x32x128xf32, #tpu.memory_space<vmem>>, vector<1x32x128xf32>
    %8 = vector.shape_cast %7 : vector<1x32x128xf32> to vector<32x128xf32>
    %9 = vector.shape_cast %6 : vector<32x128xf32> to vector<1x32x128xf32>
    tpu.vector_store %arg6[%c0_6, %c0_7, %c0_8], %9 {strides = array<i32>} : memref<1x32x128xf32, #tpu.memory_space<vmem>>, vector<1x32x128xf32>,
    return
  }
  func.func @transform_0(%arg0: i32, %arg1: i32, %arg2: i32) -> (i32, i32, i32) {
    %c0_i32 = arith.constant 0 : i32
    %c0_i32_0 = arith.constant 0 : i32
    return %arg1, %c0_i32, %arg2 : i32, i32, i32
  }
  func.func @transform_1(%arg0: i32, %arg1: i32, %arg2: i32) -> (i32, i32) {
    %c0_i32 = arith.constant 0 : i32
    %c0_i32_0 = arith.constant 0 : i32
    return %arg0, %c0_i32 : i32, i32
  }
  func.func @transform_2(%arg0: i32, %arg1: i32, %arg2: i32) -> (i32, i32) {
    %c0_i32 = arith.constant 0 : i32
    %c0_i32_0 = arith.constant 0 : i32
    return %arg0, %c0_i32 : i32, i32
  }
  func.func @transform_3(%arg0: i32, %arg1: i32, %arg2: i32) -> (i32, i32, i32) {
    %c0_i32 = arith.constant 0 : i32
    return %arg1, %arg0, %arg2 : i32, i32, i32
  }
}

</mosaic_0001>

<llo_original>
// kernel: tpu_custom_call.1
$region0: #{tpu_custom_call.1}
  #allocation0 [shape = 'u32[]', space=smem, size = 0x4, offset = 0x4, fixed_abs, tag = 'smem constant byte address 0x4 - core index']
  #allocation1 [shape = 'u32[144,128]{1,0:T(1,128)}', space=vmem, size = 0x12000, scoped, tag = 'internal scratch']
  %s0 = inlined_call_operand.hbm [shape: bf16[2,128,128], index: 0, kind: input, shape index: {}]
  %s1 = inlined_call_operand.vmem [shape: bf16[32,128], index: 1, kind: input, shape index: {}]
  %s2 = inlined_call_operand.vmem [shape: f32[32,1], index: 2, kind: input, shape index: {}]
  %s3 = inlined_call_operand.hbm [shape: f32[2,32,128], index: 3, kind: output, shape index: {}]
  %s4 = sld [smem:[#allocation0]]
  $region49: #{tpu_custom_call.1} parent=0
    _
  %s6 = ssub.s32 1, %s4
  %s7 = scalar_select 0, %s6, %s4
  $region1: #{tpu_custom_call.1} parent=0
    #allocation2 [shape = 'u8[65536]{0}', space=vmem, size = 0x10000, scoped, tag = 'input window, operand 0']
    #allocation3 [shape = 's32[2]{0}', space=sflag, size = 0x8, scoped, tag = 'scoped memory for tpu_custom_call.1']
    #allocation4 [shape = 's32[2]{0}', space=sflag, size = 0x8, scoped, tag = 'scoped memory for tpu_custom_call.1']
    #allocation5 [shape = 'u8[32768]{0}', space=vmem, size = 0x8000, scoped, tag = 'output window, operand 0']
    %8 = vsyncpa [#allocation3], 0
    %s9 = scalar_lea.sflag [#allocation3], 1
    %10 = vsyncpa %s9, 0
    %11 = vsyncpa [#allocation4], 0
    %s12 = scalar_lea.sflag [#allocation4], 1
    %13 = vsyncpa %s12, 0
    loop: start=0, step=1, limit=4
    $region2: #{tpu_custom_call.1} parent=1 // loop_pre_header
      _
    $region3: #{tpu_custom_call.1} parent=1 // loop_header
      %s15 = sphi 0, %s19
      %p16 = scmp.ge.s32.totalorder %s15, 4
      %s22 = sphi 0, %s41
      %s23 = sphi 0, %s37
      %s24 = sphi 0, %s33
      %s25 = sphi 0, %s22
      %s26 = sphi 0, %s23
      %s27 = sphi 0, %s24
      %s28 = sphi 0, %s25
      %s29 = sphi 0, %s26
      %s30 = sphi 0, %s27
      %s46 = sphi 0, %s48
      %s49 = sphi 0, %s46
      %s50 = sphi 0, %s49
      %s66 = sphi 0, %s50
      %s72 = sphi 0, %s74
      %s75 = sphi 0, %s72
      %s76 = sphi 0, %s75
      %s92 = sphi 0, %s76
      %s98 = sphi 0, %s100
      %s101 = sphi 0, %s98
      %s102 = sphi 0, %s101
      %s118 = sphi 0, %s102
      %s128 = sphi 0, %s130
      %s131 = sphi 0, %s128
      %s132 = sphi 0, %s131
      %s148 = sphi 0, %s132
    $region4: #{tpu_custom_call.1} parent=1 // loop_header_branch
      %18 = sbr.rel (%p16) target = $region8
    $region5: #{tpu_custom_call.1} parent=1 // loop_body
      %s20 = ssub.s32 %s15, 1
      %s21 = ssub.s32 %s15, 2
      %s31 = sadd.s32 1, %s24
      %p32 = scmp.ge.s32.totalorder %s31, 1
      %s33 = scalar_select %p32, 0, %s31
      %s34 = sadd.s32 1, %s23
      %s35 = scalar_select %p32, %s34, %s23
      %p36 = scmp.ge.s32.totalorder %s35, 2
      %s37 = scalar_select %p36, 0, %s35
      %s38 = sadd.s32 1, %s22
      %s39 = scalar_select %p36, %s38, %s22
      %p40 = scmp.ge.s32.totalorder %s39, 1
      %s41 = scalar_select %p40, 0, %s39
      %s42 = ssub.s32 %s23, %s37
      %s43 = ssub.s32 %s24, %s33
      %s44 = sor.u32 %s42, %s43
      %p45 = scmp.eq.s32.totalorder %s44, 0
      %s47 = sadd.s32 %s46, 1
      %s48 = scalar_select %p45, %s46, %s47
      %p51 = pneg %p45
      %p52 = scmp.eq.s32.totalorder %s15, 1
      %p53 = por %p51, %p52
      %p54 = scmp.ne.s32.totalorder %s46, %s49
      %p55 = scmp.eq.s32.totalorder %s15, 0
      %p56 = por %p54, %p55
      %p57 = scmp.ne.s32.totalorder %s46, %s49
      %p58 = scmp.eq.s32.totalorder %s20, 1
      %p59 = por %p57, %p58
      %p60 = scmp.ne.s32.totalorder %s49, %s50
      %p61 = scmp.eq.s32.totalorder %s20, 0
      %p62 = por %p60, %p61
      %p63 = scmp.ne.s32.totalorder %s49, %s50
      %p64 = scmp.eq.s32.totalorder %s21, 1
      %p65 = por %p63, %p64
      %p67 = scmp.ne.s32.totalorder %s50, %s66
      %p68 = scmp.eq.s32.totalorder %s21, 0
      %p69 = por %p67, %p68
      %s70 = ssub.s32 %s22, %s41
      %p71 = scmp.eq.s32.totalorder %s70, 0
      %s73 = sadd.s32 %s72, 1
      %s74 = scalar_select %p71, %s72, %s73
      %p77 = pneg %p71
      %p78 = scmp.eq.s32.totalorder %s15, 1
      %p79 = por %p77, %p78
      %p80 = scmp.ne.s32.totalorder %s72, %s75
      %p81 = scmp.eq.s32.totalorder %s15, 0
      %p82 = por %p80, %p81
      %p83 = scmp.ne.s32.totalorder %s72, %s75
      %p84 = scmp.eq.s32.totalorder %s20, 1
      %p85 = por %p83, %p84
      %p86 = scmp.ne.s32.totalorder %s75, %s76
      %p87 = scmp.eq.s32.totalorder %s20, 0
      %p88 = por %p86, %p87
      %p89 = scmp.ne.s32.totalorder %s75, %s76
      %p90 = scmp.eq.s32.totalorder %s21, 1
      %p91 = por %p89, %p90
      %p93 = scmp.ne.s32.totalorder %s76, %s92
      %p94 = scmp.eq.s32.totalorder %s21, 0
      %p95 = por %p93, %p94
      %s96 = ssub.s32 %s22, %s41
      %p97 = scmp.eq.s32.totalorder %s96, 0
      %s99 = sadd.s32 %s98, 1
      %s100 = scalar_select %p97, %s98, %s99
      %p103 = pneg %p97
      %p104 = scmp.eq.s32.totalorder %s15, 1
      %p105 = por %p103, %p104
      %p106 = scmp.ne.s32.totalorder %s98, %s101
      %p107 = scmp.eq.s32.totalorder %s15, 0
      %p108 = por %p106, %p107
      %p109 = scmp.ne.s32.totalorder %s98, %s101
      %p110 = scmp.eq.s32.totalorder %s20, 1
      %p111 = por %p109, %p110
      %p112 = scmp.ne.s32.totalorder %s101, %s102
      %p113 = scmp.eq.s32.totalorder %s20, 0
      %p114 = por %p112, %p113
      %p115 = scmp.ne.s32.totalorder %s101, %s102
      %p116 = scmp.eq.s32.totalorder %s21, 1
      %p117 = por %p115, %p116
      %p119 = scmp.ne.s32.totalorder %s102, %s118
      %p120 = scmp.eq.s32.totalorder %s21, 0
      %p121 = por %p119, %p120
      %s122 = ssub.s32 %s23, %s37
      %s123 = ssub.s32 %s22, %s41
      %s124 = sor.u32 %s122, %s123
      %s125 = ssub.s32 %s24, %s33
      %s126 = sor.u32 %s124, %s125
      %p127 = scmp.eq.s32.totalorder %s126, 0
      %s129 = sadd.s32 %s128, 1
      %s130 = scalar_select %p127, %s128, %s129
      %p133 = pneg %p127
      %p134 = scmp.eq.s32.totalorder %s15, 1
      %p135 = por %p133, %p134
      %p136 = scmp.ne.s32.totalorder %s128, %s131
      %p137 = scmp.eq.s32.totalorder %s15, 0
      %p138 = por %p136, %p137
      %p139 = scmp.ne.s32.totalorder %s128, %s131
      %p140 = scmp.eq.s32.totalorder %s20, 1
      %p141 = por %p139, %p140
      %p142 = scmp.ne.s32.totalorder %s131, %s132
      %p143 = scmp.eq.s32.totalorder %s20, 0
      %p144 = por %p142, %p143
      %p145 = scmp.ne.s32.totalorder %s131, %s132
      %p146 = scmp.eq.s32.totalorder %s21, 1
      %p147 = por %p145, %p146
      %p149 = scmp.ne.s32.totalorder %s132, %s148
      %p150 = scmp.eq.s32.totalorder %s21, 0
      %p151 = por %p149, %p150
      %p152 = scmp.le.s32.totalorder 1, %s15
      %p153 = scmp.lt.s32.totalorder %s15, 3
      %p154 = pnand %p152, %p153
      %p155 = pneg %p154
      // Predicated region
      $region9: #{tpu_custom_call.1} parent=5 // pred_check
        _
      $region10: #{tpu_custom_call.1} parent=5 // pred_check_branch
        %157 = sbr.rel (%p154) target = $region12
      $region11: #{tpu_custom_call.1} parent=5 // pred_region
        %s158 = ssub.s32 %s15, 1
        // Predicated region
        $region13: #{tpu_custom_call.1} parent=11 // pred_check
          %p159 = pneg %p88
        $region14: #{tpu_custom_call.1} parent=11 // pred_check_branch
          %161 = sbr.rel (%p159) target = $region16
        $region15: #{tpu_custom_call.1} parent=11 // pred_region
          %s162 = smul.u32 4, %s25
          %p163 = scmp.lt.s32.totalorder %s162, 3
          %s164 = scalar_select %p163, %s162, 3
          %s165 = smul.addr %s164, 4
          %s166 = scalar_lea.vmem %s1, %s165
          %s167 = smul.u32 4, %s25
        $region16: #{tpu_custom_call.1} parent=11 // pred_fallthru
          _
        // Predicated region
        $region17: #{tpu_custom_call.1} parent=11 // pred_check
          %p168 = pneg %p114
        $region18: #{tpu_custom_call.1} parent=11 // pred_check_branch
          %170 = sbr.rel (%p168) target = $region20
        $region19: #{tpu_custom_call.1} parent=11 // pred_region
          %s171 = smul.u32 4, %s25
          %p172 = scmp.lt.s32.totalorder %s171, 3
          %s173 = scalar_select %p172, %s171, 3
          %s174 = smul.addr %s173, 8
          %s175 = scalar_lea.vmem %s2, %s174
          %s176 = smul.u32 4, %s25
        $region20: #{tpu_custom_call.1} parent=11 // pred_fallthru
          _
      $region12: #{tpu_custom_call.1} parent=5 // pred_fallthru
        _
      %p177 = scmp.lt.s32.totalorder %s15, 2
      // Predicated region
      $region21: #{tpu_custom_call.1} parent=5 // pred_check
        %p178 = pneg %p177
      $region22: #{tpu_custom_call.1} parent=5 // pred_check_branch
        %180 = sbr.rel (%p178) target = $region24
      $region23: #{tpu_custom_call.1} parent=5 // pred_region
        // Predicated region
        $region25: #{tpu_custom_call.1} parent=23 // pred_check
          %p181 = pneg %p56
        $region26: #{tpu_custom_call.1} parent=23 // pred_check_branch
          %183 = sbr.rel (%p181) target = $region28
        $region27: #{tpu_custom_call.1} parent=23 // pred_region
          %s184 = sand.u32 %s46, 1
          %s185 = scalar_lea.sflag [#allocation3], %s184
          %s186 = sand.u32 %s46, 1
          %s187 = smul.addr %s186, 64
          %s188 = scalar_lea.vmem [#allocation2], %s187
          %s190 = ssub.s32 1024, 1024
          %191 = vsyncadd %s185, %s190
          %s192 = smul.addr %s23, 16
          %s193 = sadd.s32 %s24, %s192
          %s194 = smul.addr %s193, 64
          %s195 = scalar_lea.hbm %s0, %s194
          %s196 = sshll.u32 %s188, 4
          %s197 = int_to_ptr.vmem [resolvable:$true] %s196
          %202 = dma.hbm_to_vmem [thread:$0]  %s195, 1024, %s197, %s185, 64, 64, 4
        $region28: #{tpu_custom_call.1} parent=23 // pred_fallthru
          _
      $region24: #{tpu_custom_call.1} parent=5 // pred_fallthru
        _
      %p203 = scmp.le.s32.totalorder 1, %s15
      %p204 = scmp.lt.s32.totalorder %s15, 3
      %p205 = pnand %p203, %p204
      %p206 = pneg %p205
      // Predicated region
      $region29: #{tpu_custom_call.1} parent=5 // pred_check
        _
      $region30: #{tpu_custom_call.1} parent=5 // pred_check_branch
        %208 = sbr.rel (%p205) target = $region32
      $region31: #{tpu_custom_call.1} parent=5 // pred_region
        %s209 = ssub.s32 %s15, 1
        %s210 = sand.u32 %s49, 1
        %s211 = scalar_lea.sflag [#allocation3], %s210
        %s212 = sand.u32 %s49, 1
        %s213 = smul.addr %s212, 64
        %s214 = scalar_lea.vmem [#allocation2], %s213
        // Predicated region
        $region33: #{tpu_custom_call.1} parent=31 // pred_check
          %p215 = pneg %p62
        $region34: #{tpu_custom_call.1} parent=31 // pred_check_branch
          %217 = sbr.rel (%p215) target = $region36
        $region35: #{tpu_custom_call.1} parent=31 // pred_region
          %218 = dma.done %s211, 1024
        $region36: #{tpu_custom_call.1} parent=31 // pred_fallthru
          _
        %s219 = sand.u32 %s49, 1
        %s220 = scalar_lea.sflag [#allocation3], %s219
        %s221 = sand.u32 %s49, 1
        %s222 = smul.addr %s221, 64
        %s223 = scalar_lea.vmem [#allocation2], %s222
        %p224 = pneg %p62
        %p225 = pneg %p59
        %s226 = smul.u32 4, %s25
        %p227 = scmp.lt.s32.totalorder %s226, 3
        %s228 = scalar_select %p227, %s226, 3
        %s229 = smul.addr %s228, 4
        %s230 = scalar_lea.vmem %s1, %s229
        %p231 = pneg %p88
        %p232 = pneg %p85
        %s233 = smul.u32 4, %s25
        %p234 = scmp.lt.s32.totalorder %s233, 3
        %s235 = scalar_select %p234, %s233, 3
        %s236 = smul.addr %s235, 8
        %s237 = scalar_lea.vmem %s2, %s236
        %p238 = pneg %p114
        %p239 = pneg %p111
        %p240 = pneg %p144
        %p241 = pneg %p141
        %s242 = sand.u32 %s131, 1
        %s243 = scalar_lea.sflag [#allocation4], %s242
        %s244 = sand.u32 %s131, 1
        %s245 = smul.addr %s244, 32
        %s246 = scalar_lea.vmem [#allocation5], %s245
        %s247 = smul.u32 4, %s25
        %p248 = scmp.lt.s32.totalorder %s247, 3
        %s249 = scalar_select %p248, %s247, 3
        %s250 = smul.addr %s249, 4
        %s251 = scalar_lea.vmem %s1, %s250
        %s252 = smul.u32 4, %s25
        %s253 = smul.u32 4, %s25
        %p254 = scmp.lt.s32.totalorder %s253, 3
        %s255 = scalar_select %p254, %s253, 3
        %s256 = smul.addr %s255, 8
        %s257 = scalar_lea.vmem %s2, %s256
        %s258 = smul.u32 4, %s25
        %s259 = smul.u32 4, %s25
        %v261 = vld [vmem:[%s251] sm:$0xf]
        %v262 = vld [vmem:[%s251 + $0x4] sm:$0xf]
        %v263 = vld [vmem:[%s251 + $0x8] sm:$0xf]
        %v264 = vld [vmem:[%s251 + $0xc] sm:$0xf]
        %v265 = vld [vmem:[%s214] sm:$0xf]
        %v266 = vld [vmem:[%s214 + $0x4] sm:$0xf]
        %v267 = vld [vmem:[%s214 + $0x8] sm:$0xf]
        %v268 = vld [vmem:[%s214 + $0xc] sm:$0xf]
        %v269 = vld [vmem:[%s214 + $0x10] sm:$0xf]
        %v270 = vld [vmem:[%s214 + $0x14] sm:$0xf]
        %v271 = vld [vmem:[%s214 + $0x18] sm:$0xf]
        %v272 = vld [vmem:[%s214 + $0x1c] sm:$0xf]
        %v273 = vld [vmem:[%s214 + $0x20] sm:$0xf]
        %v274 = vld [vmem:[%s214 + $0x24] sm:$0xf]
        %v275 = vld [vmem:[%s214 + $0x28] sm:$0xf]
        %v276 = vld [vmem:[%s214 + $0x2c] sm:$0xf]
        %v277 = vld [vmem:[%s214 + $0x30] sm:$0xf]
        %v278 = vld [vmem:[%s214 + $0x34] sm:$0xf]
        %v279 = vld [vmem:[%s214 + $0x38] sm:$0xf]
        %v280 = vld [vmem:[%s214 + $0x3c] sm:$0xf]
        %v281 = vld [vmem:[%s257] sm:$0xff]
        %v282 = vld [vmem:[%s257 + $0x8] sm:$0xff]
        %v283 = vld [vmem:[%s257 + $0x10] sm:$0xff]
        %v284 = vld [vmem:[%s257 + $0x18] sm:$0xff]
        %286 = vset.pattern.permute.xlu0 0
        %287 = vperm.xlu0 %286, %v281
        %v288 = vpop.permute.xlu0 %287
        %291 = vset.pattern.permute.xlu0 0
        %292 = vperm.xlu0 %291, %v282
        %v293 = vpop.permute.xlu0 %292
        %296 = vset.pattern.permute.xlu0 0
        %297 = vperm.xlu0 %296, %v283
        %v298 = vpop.permute.xlu0 %297
        %301 = vset.pattern.permute.xlu0 0
        %302 = vperm.xlu0 %301, %v284
        %v303 = vpop.permute.xlu0 %302
        %v309 = vunpack.c.l.b16 %v261
        %v310 = vunpack.c.l.b16 %v262
        %v311 = vunpack.c.l.b16 %v263
        %v312 = vunpack.c.l.b16 %v264
        %v313 = vpack.c.b16 %v310, %v309
        %v314 = vpack.c.b16 %v312, %v311
        %v333 = vunpack.c.l.b16 %v265
        %v334 = vunpack.c.l.b16 %v266
        %v335 = vunpack.c.l.b16 %v267
        %v336 = vunpack.c.l.b16 %v268
        %v337 = vunpack.c.l.b16 %v269
        %v338 = vunpack.c.l.b16 %v270
        %v339 = vunpack.c.l.b16 %v271
        %v340 = vunpack.c.l.b16 %v272
        %v341 = vunpack.c.l.b16 %v273
        %v342 = vunpack.c.l.b16 %v274
        %v343 = vunpack.c.l.b16 %v275
        %v344 = vunpack.c.l.b16 %v276
        %v345 = vunpack.c.l.b16 %v277
        %v346 = vunpack.c.l.b16 %v278
        %v347 = vunpack.c.l.b16 %v279
        %v348 = vunpack.c.l.b16 %v280
        %v349 = vpack.c.b16 %v334, %v333
        %v350 = vpack.c.b16 %v336, %v335
        %v351 = vpack.c.b16 %v338, %v337
        %v352 = vpack.c.b16 %v340, %v339
        %v353 = vpack.c.b16 %v342, %v341
        %v354 = vpack.c.b16 %v344, %v343
        %v355 = vpack.c.b16 %v346, %v345
        %v356 = vpack.c.b16 %v348, %v347
        %365 = vmatprep.subr.bf16.mxu0 0
        %366 = vmatpush1.bf16.msra.mxu0 %v349
        %367 = vmatprep.subr.bf16.mxu0 0
        %368 = vmatpush1.bf16.msra.mxu0 %v350
        %369 = vmatprep.subr.bf16.mxu0 0
        %370 = vmatpush1.bf16.msra.mxu0 %v351
        %371 = vmatprep.subr.bf16.mxu0 0
        %372 = vmatpush1.bf16.msra.mxu0 %v352
        %373 = vmatprep.subr.bf16.mxu0 0
        %374 = vmatpush1.bf16.msra.mxu0 %v353
        %375 = vmatprep.subr.bf16.mxu0 0
        %376 = vmatpush1.bf16.msra.mxu0 %v354
        %377 = vmatprep.subr.bf16.mxu0 0
        %378 = vmatpush1.bf16.msra.mxu0 %v355
        %379 = vmatprep.subr.bf16.mxu0 0
        %380 = vmatpush1.bf16.msra.mxu0 %v356
        %381 = vmatprep.subr.bf16.mxu0 0
        %382 = vmatpush1.bf16.msra.mxu0 0
        %383 = vmatprep.subr.bf16.mxu0 0
        %384 = vmatpush1.bf16.msra.mxu0 0
        %385 = vmatprep.subr.bf16.mxu0 0
        %386 = vmatpush1.bf16.msra.mxu0 0
        %387 = vmatprep.subr.bf16.mxu0 0
        %388 = vmatpush1.bf16.msra.mxu0 0
        %389 = vmatprep.subr.bf16.mxu0 0
        %390 = vmatpush1.bf16.msra.mxu0 0
        %391 = vmatprep.subr.bf16.mxu0 0
        %392 = vmatpush1.bf16.msra.mxu0 0
        %393 = vmatprep.subr.bf16.mxu0 0
        %394 = vmatpush1.bf16.msra.mxu0 0
        %395 = vmatprep.subr.bf16.mxu0 0
        %396 = vmatpush1.bf16.msra.mxu0 0
        %397 = vmatprep.mubr.bf16.mxu0 0
        %398 = vmatmul.mubr.bf16.gmra.mrb[0].mxu0 %v313
        %v399 = vpop.f32.mrb[0].mxu0
        %v400 = vadd.f32 %v288, %v399
        %v401 = vpop.f32.mrb[0].mxu0
        %v402 = vpop.f32.mrb[0].mxu0
        %v403 = vadd.f32 %v293, %v402
        %v404 = vpop.f32.mrb[0].mxu0
        %405 = vmatprep.mubr.bf16.mxu0 0
        %406 = vmatmul.mubr.bf16.gmra.mrb[0].mxu0 %v314
        %v407 = vpop.f32.mrb[0].mxu0
        %v408 = vadd.f32 %v298, %v407
        %v409 = vpop.f32.mrb[0].mxu0
        %v410 = vpop.f32.mrb[0].mxu0
        %v411 = vadd.f32 %v303, %v410
        %v412 = vpop.f32.mrb[0].mxu0
        %413 = vdwg.mxu0
        %414 = vst [vmem:[%s246] sm:$0xff] %v400
        %415 = vst [vmem:[%s246 + $0x8] sm:$0xff] %v403
        %416 = vst [vmem:[%s246 + $0x10] sm:$0xff] %v408
        %417 = vst [vmem:[%s246 + $0x18] sm:$0xff] %v411
        %s418 = sand.u32 %s131, 1
        %s419 = scalar_lea.sflag [#allocation4], %s418
        %s420 = sand.u32 %s131, 1
        %s421 = smul.addr %s420, 32
        %s422 = scalar_lea.vmem [#allocation5], %s421
        // Predicated region
        $region37: #{tpu_custom_call.1} parent=31 // pred_check
          %p423 = pneg %p141
        $region38: #{tpu_custom_call.1} parent=31 // pred_check_branch
          %425 = sbr.rel (%p423) target = $region40
        $region39: #{tpu_custom_call.1} parent=31 // pred_region
          %s426 = smul.u32 4, %s25
          %s428 = ssub.s32 512, 512
          %429 = vsyncadd %s419, %s428
          %s430 = sadd.s32 %s27, %s426
          %s431 = smul.addr %s26, 4
          %s432 = sadd.s32 %s430, %s431
          %s433 = smul.addr %s432, 128
          %s434 = scalar_lea.hbm %s3, %s433
          %s435 = sshll.u32 %s422, 4
          %s436 = int_to_ptr.vmem [resolvable:$true] %s435
          %441 = dma.vmem_to_hbm [thread:$0]  %s436, 512, %s434, %s419, 128, 128, 8
        $region40: #{tpu_custom_call.1} parent=31 // pred_fallthru
          _
      $region32: #{tpu_custom_call.1} parent=5 // pred_fallthru
        _
      %p442 = scmp.le.s32.totalorder 2, %s15
      // Predicated region
      $region41: #{tpu_custom_call.1} parent=5 // pred_check
        %p443 = pneg %p442
      $region42: #{tpu_custom_call.1} parent=5 // pred_check_branch
        %445 = sbr.rel (%p443) target = $region44
      $region43: #{tpu_custom_call.1} parent=5 // pred_region
        %s446 = ssub.s32 %s15, 2
        // Predicated region
        $region45: #{tpu_custom_call.1} parent=43 // pred_check
          %p447 = pneg %p147
        $region46: #{tpu_custom_call.1} parent=43 // pred_check_branch
          %449 = sbr.rel (%p447) target = $region48
        $region47: #{tpu_custom_call.1} parent=43 // pred_region
          %s450 = sand.u32 %s132, 1
          %s451 = scalar_lea.sflag [#allocation4], %s450
          %s452 = sand.u32 %s132, 1
          %s453 = smul.addr %s452, 32
          %s454 = scalar_lea.vmem [#allocation5], %s453
          %455 = dma.done %s451, 512
        $region48: #{tpu_custom_call.1} parent=43 // pred_fallthru
          _
      $region44: #{tpu_custom_call.1} parent=5 // pred_fallthru
        _
    $region6: #{tpu_custom_call.1} parent=1 // loop_footer
      %s19 = sadd.s32 1, %s15
    $region7: #{tpu_custom_call.1} parent=1 // loop_footer_branch
      %14 = sbr.rel target = $region3
    $region8: #{tpu_custom_call.1} parent=1 // loop_exit
      _
    %456 = vsyncpa [#allocation3], 1
    %s457 = scalar_lea.sflag [#allocation3], 1
    %458 = vsyncpa %s457, 1
    %459 = vsyncpa [#allocation4], 1
    %s460 = scalar_lea.sflag [#allocation4], 1
    %461 = vsyncpa %s460, 1

</llo_original>
